<compile_context>
chip_gen: v5e
topology: v5e:2x2
jax: 0.10.0
libtpu: 0.0.40
codegen_flags: <defaults>
</compile_context>

<pallas_src>
import functools

import jax
import jax.numpy as jnp
from jax.experimental import pallas as pl
from jax.experimental.pallas import tpu as pltpu


def _round_up(x, m):
    return ((x + m - 1) // m) * m


def _gan_loss_kernel(prob_ref, target_ref, reward_ref, out_ref, acc_ref,
                     *, n_rows, n_cols, blocks_per_split):
    # prob_ref:   (TM, TC) input dtype (f32/bf16) VMEM
    # target_ref: (TM, 1)  int32   VMEM
    # reward_ref: (TM, 1)  f32/bf16 VMEM
    # out_ref:    (8, 128) f32     VMEM  (per-core-split partial, lane-dense)
    # acc_ref:    (1,)     f32     SMEM  scalar accumulator
    c = pl.program_id(0)   # core split
    i = pl.program_id(1)   # row block within this split
    j = pl.program_id(2)   # col block (innermost reduction axis)

    @pl.when((i == 0) & (j == 0))
    def _init():
        acc_ref[0] = jnp.float32(0.0)

    # Upcast in-register; accumulate in f32 (works for bf16 inputs too).
    prob = prob_ref[...].astype(jnp.float32)          # (TM, TC)
    tgt = target_ref[...]                             # (TM, 1) int32
    rwd = reward_ref[...].astype(jnp.float32)         # (TM, 1)

    tm, tc = prob.shape
    # Loop-invariant iota; shift target into this C-tile's local frame instead
    # of regenerating offset iotas per tile.
    col_ids = jax.lax.broadcasted_iota(jnp.int32, (tm, tc), 1)
    local_tgt = tgt - j * tc
    one_hot = col_ids == local_tgt                    # (TM, TC) bool

    # Mask remainder / duplicated row blocks and out-of-range targets.
    row_start = (c * blocks_per_split + i) * tm
    row_ids = jax.lax.broadcasted_iota(jnp.int32, (tm, 1), 0) + row_start
    valid = (row_ids < n_rows) & (tgt >= 0) & (tgt < n_cols)   # (TM, 1) bool

    # Fused select * reward, single full-tile reduction.
    contrib = jnp.where(one_hot & valid, prob * rwd, 0.0)
    acc_ref[0] += jnp.sum(contrib)

    @pl.when((i == pl.num_programs(1) - 1) & (j == pl.num_programs(2) - 1))
    def _flush():
        # Negated partial for this core split, broadcast over the lane-dense
        # (8, 128) output block (avoids masked sub-tile stores).
        out_ref[...] = jnp.full(out_ref.shape, -acc_ref[0], dtype=jnp.float32)


def gan_loss(prob, target, reward, *, block_rows=None, block_cols=None,
             num_core_splits=2):
    """prob: (N, C), target: (N,) int, reward: (N,) -> scalar f32 loss."""
    N, C = prob.shape
    target2d = target.astype(jnp.int32).reshape(N, 1)
    reward2d = reward.reshape(N, 1)            # keep dtype; upcast in-kernel

    itemsize = jnp.dtype(prob.dtype).itemsize
    if block_rows is None:
        block_rows = min(512, _round_up(N, 8))
    if block_cols is None:
        if C <= 2048:
            block_cols = C                     # full lane extent, no C tiling
        else:
            # Cap prob tile at ~8 MiB per buffer (x2 double-buffered = 16 MiB),
            # safe within v7x's 64 MiB physical VMEM as well as v5e/v6e.
            max_cols = max(128, ((8 << 20) // (block_rows * itemsize)) // 128 * 128)
            block_cols = min(_round_up(C, 128), max_cols)

    n_row_blocks = pl.cdiv(N, block_rows)
    n_col_blocks = pl.cdiv(C, block_cols)
    num_core_splits = max(1, min(num_core_splits, n_row_blocks))
    blocks_per_split = pl.cdiv(n_row_blocks, num_core_splits)

    def prob_map(c, i, j):
        # Clamp so the (possibly ragged) last split never indexes past the
        # final row block; duplicated rows are masked out in the kernel.
        return (jnp.minimum(c * blocks_per_split + i, n_row_blocks - 1), j)

    def vec_map(c, i, j):
        return (jnp.minimum(c * blocks_per_split + i, n_row_blocks - 1), 0)

    kernel = functools.partial(
        _gan_loss_kernel,
        n_rows=N, n_cols=C, blocks_per_split=blocks_per_split)

    out = pl.pallas_call(
        kernel,
        out_shape=jax.ShapeDtypeStruct((num_core_splits * 8, 128), jnp.float32),
        grid_spec=pltpu.PrefetchScalarGridSpec(
            num_scalar_prefetch=0,
            grid=(num_core_splits, blocks_per_split, n_col_blocks),
            in_specs=[
                pl.BlockSpec((block_rows, block_cols), prob_map),
                pl.BlockSpec((block_rows, 1), vec_map),
                pl.BlockSpec((block_rows, 1), vec_map),
            ],
            out_specs=pl.BlockSpec((8, 128), lambda c, i, j: (c, 0)),
            scratch_shapes=[pltpu.SMEM((1,), jnp.float32)],
        ),
        compiler_params=pltpu.CompilerParams(
            dimension_semantics=("parallel", "arbitrary", "arbitrary"),
            vmem_limit_bytes=48 * 1024 * 1024,
        ),
    )(prob, target2d, reward2d)

    # One negated partial per core split lives at lane 0 of each (8,128) block.
    partials = out.reshape(num_core_splits, 8, 128)[:, 0, 0]
    return jnp.sum(partials)


def _reference(prob, target, reward):
    N = prob.shape[0]
    return -jnp.sum(prob[jnp.arange(N), target] * reward)


if __name__ == "__main__":
    key = jax.random.PRNGKey(0)
    k1, k2, k3, k4, k5, k6 = jax.random.split(key, 6)

    # Small shapes consistent with the module: N samples, C vocabulary classes.
    N, C = 8, 32
    prob = jax.nn.log_softmax(jax.random.normal(k1, (N, C), jnp.float32), axis=-1)
    target = jax.random.randint(k2, (N,), 0, C, jnp.int32)
    reward = jax.random.uniform(k3, (N,), jnp.float32)

    loss = jax.block_until_ready(gan_loss(prob, target, reward))
    ref = _reference(prob, target, reward)
    assert jnp.allclose(loss, ref, rtol=1e-5, atol=1e-5), (loss, ref)

    # Exercise the tiled / multi-split path (remainder rows, per-core partials).
    N2, C2 = 1000, 300
    prob2 = jax.nn.log_softmax(jax.random.normal(k4, (N2, C2), jnp.float32), axis=-1)
    target2 = jax.random.randint(k5, (N2,), 0, C2, jnp.int32)
    reward2 = jax.random.uniform(k6, (N2,), jnp.float32)

    loss2 = jax.block_until_ready(gan_loss(prob2, target2, reward2))
    ref2 = _reference(prob2, target2, reward2)
    assert jnp.allclose(loss2, ref2, rtol=1e-5, atol=1e-4), (loss2, ref2)

    # Same data with explicit small tiles to exercise C tiling + boundary cols.
    loss3 = jax.block_until_ready(
        gan_loss(prob2, target2, reward2, block_rows=128, block_cols=128))
    assert jnp.allclose(loss3, ref2, rtol=1e-5, atol=1e-4), (loss3, ref2)

    print("KERNEL_OK")
</pallas_src>

<mosaic_0001>
module attributes {stable_mosaic.version = 11 : i64} {
  func.func @_gan_loss_kernel(%arg0: i32, %arg1: i32, %arg2: i32, %arg3: memref<8x32xf32, #tpu.memory_space<vmem>>, %arg4: memref<8x1xi32, #tpu.memory_space<vmem>>, %arg5: memref<8x1xf32, #tpu.memory_space<vmem>>, %arg6: memref<8x128xf32, #tpu.memory_space<vmem>>, %arg7: memref<1xf32, #tpu.memory_space<smem>>) attributes {dimension_semantics = [#tpu.dimension_semantics<parallel>, #tpu.dimension_semantics<arbitrary>, #tpu.dimension_semantics<arbitrary>], iteration_bounds = array<i64: 1, 1, 1>, scalar_prefetch = 0 : i64, scratch_operands = 1 : i64, tpu.core_type = #tpu.core_type<tc>, window_params = [{transform_indices = @transform_0, window_bounds = array<i64: 8, 32>}, {transform_indices = @transform_1, window_bounds = array<i64: 8, 1>}, {transform_indices = @transform_2, window_bounds = array<i64: 8, 1>}, {transform_indices = @transform_3, window_bounds = array<i64: 8, 128>}]} {
    %c0_i32 = arith.constant 0 : i32
    %0 = arith.cmpi eq, %arg1, %c0_i32 : i32
    %c0_i32_0 = arith.constant 0 : i32
    %1 = arith.cmpi eq, %arg2, %c0_i32_0 : i32
    %2 = arith.andi %0, %1 : i1
    %3 = arith.extui %2 : i1 to i32
    %c0_i32_1 = arith.constant 0 : i32
    %4 = arith.cmpi ne, %3, %c0_i32_1 : i32
    scf.if %4 {
      %cst_16 = arith.constant 0.000000e+00 : f32
      %c0_17 = arith.constant 0 : index
      %46 = memref.load %arg7[%c0_17] : memref<1xf32, #tpu.memory_space<smem>>
      memref.store %cst_16, %arg7[%c0_17] : memref<1xf32, #tpu.memory_space<smem>>
    } else {
    }
    %c0 = arith.constant 0 : index
    %c0_2 = arith.constant 0 : index
    %5 = vector.load %arg3[%c0, %c0_2] : memref<8x32xf32, #tpu.memory_space<vmem>>, vector<8x32xf32>
    %c0_3 = arith.constant 0 : index
    %c0_4 = arith.constant 0 : index
    %6 = vector.load %arg4[%c0_3, %c0_4] : memref<8x1xi32, #tpu.memory_space<vmem>>, vector<8x1xi32>
    %c0_5 = arith.constant 0 : index
    %c0_6 = arith.constant 0 : index
    %7 = vector.load %arg5[%c0_5, %c0_6] : memref<8x1xf32, #tpu.memory_space<vmem>>, vector<8x1xf32>
    %8 = tpu.iota {dimensions = array<i32: 1>} : vector<8x32xi32>
    %c32_i32 = arith.constant 32 : i32
    %9 = arith.muli %arg2, %c32_i32 : i32
    %10 = vector.broadcast %9 : i32 to vector<8x1xi32>
    %11 = arith.subi %6, %10 : vector<8x1xi32>
    %12 = vector.broadcast %11 : vector<8x1xi32> to vector<8x32xi32>
    %13 = arith.cmpi eq, %8, %12 : vector<8x32xi32>
    %c1_i32 = arith.constant 1 : i32
    %14 = arith.muli %arg0, %c1_i32 : i32
    %15 = arith.addi %14, %arg1 : i32
    %c8_i32 = arith.constant 8 : i32
    %16 = arith.muli %15, %c8_i32 : i32
    %17 = tpu.iota {dimensions = array<i32: 0>} : vector<8x1xi32>
    %18 = vector.broadcast %16 : i32 to vector<8x1xi32>
    %19 = arith.addi %17, %18 : vector<8x1xi32>
    %c8_i32_7 = arith.constant 8 : i32
    %20 = vector.broadcast %c8_i32_7 : i32 to vector<8x1xi32>
    %21 = arith.cmpi slt, %19, %20 : vector<8x1xi32>
    %c0_i32_8 = arith.constant 0 : i32
    %22 = vector.broadcast %c0_i32_8 : i32 to vector<8x1xi32>
    %23 = arith.cmpi sge, %6, %22 : vector<8x1xi32>
    %24 = arith.andi %21, %23 : vector<8x1xi1>
    %c32_i32_9 = arith.constant 32 : i32
    %25 = vector.broadcast %c32_i32_9 : i32 to vector<8x1xi32>
    %26 = arith.cmpi slt, %6, %25 : vector<8x1xi32>
    %27 = arith.andi %24, %26 : vector<8x1xi1>
    %28 = vector.broadcast %27 : vector<8x1xi1> to vector<8x32xi1>
    %29 = arith.andi %13, %28 : vector<8x32xi1>
    %30 = vector.broadcast %7 : vector<8x1xf32> to vector<8x32xf32>
    %31 = arith.mulf %5, %30 : vector<8x32xf32>
    %cst = arith.constant 0.000000e+00 : f32
    %32 = vector.broadcast %cst : f32 to vector<8x32xf32>
    %33 = arith.select %29, %31, %32 : vector<8x32xi1>, vector<8x32xf32>
    %c0_10 = arith.constant 0 : index
    %34 = memref.load %arg7[%c0_10] : memref<1xf32, #tpu.memory_space<smem>>
    %35 = vector.shape_cast %33 : vector<8x32xf32> to vector<1x8x32xf32>
    %cst_11 = arith.constant dense<0.000000e+00> : vector<1xf32>
    %36 = vector.multi_reduction <add>, %35, %cst_11 [1, 2] : vector<1x8x32xf32> to vector<1xf32>
    %37 = vector.shape_cast %36 : vector<1xf32> to vector<1x1x1xf32>
    %38 = vector.extract %37[0, 0, 0] : f32 from vector<1x1x1xf32>
    %39 = arith.addf %34, %38 : f32
    %c0_12 = arith.constant 0 : index
    %40 = memref.load %arg7[%c0_12] : memref<1xf32, #tpu.memory_space<smem>>
    memref.store %39, %arg7[%c0_12] : memref<1xf32, #tpu.memory_space<smem>>
    %c0_i32_13 = arith.constant 0 : i32
    %41 = arith.cmpi eq, %arg1, %c0_i32_13 : i32
    %c0_i32_14 = arith.constant 0 : i32
    %42 = arith.cmpi eq, %arg2, %c0_i32_14 : i32
    %43 = arith.andi %41, %42 : i1
    %44 = arith.extui %43 : i1 to i32
    %c0_i32_15 = arith.constant 0 : i32
    %45 = arith.cmpi ne, %44, %c0_i32_15 : i32
    scf.if %45 {
      %c0_16 = arith.constant 0 : index
      %46 = memref.load %arg7[%c0_16] : memref<1xf32, #tpu.memory_space<smem>>
      %cst_17 = arith.constant 0.000000e+00 : f32
      %47 = arith.subf %cst_17, %46 : f32
      %48 = vector.broadcast %47 : f32 to vector<8x128xf32>
      %c0_18 = arith.constant 0 : index
      %c0_19 = arith.constant 0 : index
      %49 = vector.load %arg6[%c0_18, %c0_19] : memref<8x128xf32, #tpu.memory_space<vmem>>, vector<8x128xf32>
      tpu.vector_store %arg6[%c0_18, %c0_19], %48 {strides = array<i32>} : memref<8x128xf32, #tpu.memory_space<vmem>>, vector<8x128xf32>,
    } else {
    }
    return
  }
  func.func @transform_0(%arg0: i32, %arg1: i32, %arg2: i32) -> (i32, i32) {
    %c1_i32 = arith.constant 1 : i32
    %0 = arith.muli %arg0, %c1_i32 : i32
    %1 = arith.addi %0, %arg1 : i32
    %c0_i32 = arith.constant 0 : i32
    %2 = arith.minsi %1, %c0_i32 : i32
    %c0_i32_0 = arith.constant 0 : i32
    return %2, %arg2 : i32, i32
  }
  func.func @transform_1(%arg0: i32, %arg1: i32, %arg2: i32) -> (i32, i32) {
    %c1_i32 = arith.constant 1 : i32
    %0 = arith.muli %arg0, %c1_i32 : i32
    %1 = arith.addi %0, %arg1 : i32
    %c0_i32 = arith.constant 0 : i32
    %2 = arith.minsi %1, %c0_i32 : i32
    %c0_i32_0 = arith.constant 0 : i32
    %c0_i32_1 = arith.constant 0 : i32
    return %2, %c0_i32_0 : i32, i32
  }
  func.func @transform_2(%arg0: i32, %arg1: i32, %arg2: i32) -> (i32, i32) {
    %c1_i32 = arith.constant 1 : i32
    %0 = arith.muli %arg0, %c1_i32 : i32
    %1 = arith.addi %0, %arg1 : i32
    %c0_i32 = arith.constant 0 : i32
    %2 = arith.minsi %1, %c0_i32 : i32
    %c0_i32_0 = arith.constant 0 : i32
    %c0_i32_1 = arith.constant 0 : i32
    return %2, %c0_i32_0 : i32, i32
  }
  func.func @transform_3(%arg0: i32, %arg1: i32, %arg2: i32) -> (i32, i32) {
    %c0_i32 = arith.constant 0 : i32
    %c0_i32_0 = arith.constant 0 : i32
    return %arg0, %c0_i32 : i32, i32
  }
}

</mosaic_0001>

<llo_original>
// kernel: tpu_custom_call.1
$region0: #{tpu_custom_call.1}
  #allocation0 [shape = 'u32[]', space=smem, size = 0x4, offset = 0x4, fixed_abs, tag = 'smem constant byte address 0x4 - core index']
  #allocation1 [shape = 'u32[72,128]{1,0:T(1,128)}', space=vmem, size = 0x9000, scoped, tag = 'internal scratch']
  #allocation2 [shape = 'f32[1]{0:T(128)}', space=smem, size = 0x200, scoped, tag = 'scratch operand']
  %s0 = inlined_call_operand.vmem [shape: f32[8,32], index: 0, kind: input, shape index: {}]
  %s1 = inlined_call_operand.vmem [shape: s32[8,1], index: 1, kind: input, shape index: {}]
  %s2 = inlined_call_operand.vmem [shape: f32[8,1], index: 2, kind: input, shape index: {}]
  %s3 = inlined_call_operand.hbm [shape: f32[8,128], index: 3, kind: output, shape index: {}]
  %s4 = sld [smem:[#allocation0]]
  $region30: #{tpu_custom_call.1} parent=0
    _
  %s6 = ssub.s32 1, %s4
  %s7 = scalar_select 0, %s6, %s4
  $region1: #{tpu_custom_call.1} parent=0
    #allocation3 [shape = 'u8[4096]{0}', space=vmem, size = 0x1000, scoped, tag = 'output window, operand 0, single buffered']
    #allocation4 [shape = 's32[1]{0}', space=sflag, size = 0x4, scoped, tag = 'scoped memory for tpu_custom_call.1']
    %8 = vsyncpa [#allocation4], 0
    // Predicated region
    $region2: #{tpu_custom_call.1} parent=1 // pred_check
      _
    $region3: #{tpu_custom_call.1} parent=1 // pred_check_branch
      %10 = sbr.rel (0) target = $region5
    $region4: #{tpu_custom_call.1} parent=1 // pred_region
      %s11 = sadd.s32 0, 0
      %p12 = scmp.lt.s32.totalorder %s11, 0
      %s13 = scalar_select %p12, %s11, 0
      %p14 = scmp.lt.s32.totalorder %s13, 0
      %s15 = scalar_select %p14, %s13, 0
      %s16 = smul.addr %s15, 8
      %s17 = scalar_lea.vmem %s0, %s16
      %s18 = sadd.s32 0, 0
      %p19 = scmp.lt.s32.totalorder %s18, 0
      %s20 = scalar_select %p19, %s18, 0
    $region5: #{tpu_custom_call.1} parent=1 // pred_fallthru
      _
    // Predicated region
    $region6: #{tpu_custom_call.1} parent=1 // pred_check
      _
    $region7: #{tpu_custom_call.1} parent=1 // pred_check_branch
      %22 = sbr.rel (0) target = $region9
    $region8: #{tpu_custom_call.1} parent=1 // pred_region
      %s23 = sadd.s32 0, 0
      %p24 = scmp.lt.s32.totalorder %s23, 0
      %s25 = scalar_select %p24, %s23, 0
      %p26 = scmp.lt.s32.totalorder %s25, 0
      %s27 = scalar_select %p26, %s25, 0
      %s28 = smul.addr %s27, 8
      %s29 = scalar_lea.vmem %s1, %s28
      %s30 = sadd.s32 0, 0
      %p31 = scmp.lt.s32.totalorder %s30, 0
      %s32 = scalar_select %p31, %s30, 0
    $region9: #{tpu_custom_call.1} parent=1 // pred_fallthru
      _
    // Predicated region
    $region10: #{tpu_custom_call.1} parent=1 // pred_check
      _
    $region11: #{tpu_custom_call.1} parent=1 // pred_check_branch
      %34 = sbr.rel (0) target = $region13
    $region12: #{tpu_custom_call.1} parent=1 // pred_region
      %s35 = sadd.s32 0, 0
      %p36 = scmp.lt.s32.totalorder %s35, 0
      %s37 = scalar_select %p36, %s35, 0
      %p38 = scmp.lt.s32.totalorder %s37, 0
      %s39 = scalar_select %p38, %s37, 0
      %s40 = smul.addr %s39, 8
      %s41 = scalar_lea.vmem %s2, %s40
      %s42 = sadd.s32 0, 0
      %p43 = scmp.lt.s32.totalorder %s42, 0
      %s44 = scalar_select %p43, %s42, 0
    $region13: #{tpu_custom_call.1} parent=1 // pred_fallthru
      _
    %s45 = sadd.s32 0, 0
    %p46 = scmp.lt.s32.totalorder %s45, 0
    %s47 = scalar_select %p46, %s45, 0
    %p48 = scmp.lt.s32.totalorder %s47, 0
    %s49 = scalar_select %p48, %s47, 0
    %s50 = smul.addr %s49, 8
    %s51 = scalar_lea.vmem %s0, %s50
    %s52 = sadd.s32 0, 0
    %p53 = scmp.lt.s32.totalorder %s52, 0
    %s54 = scalar_select %p53, %s52, 0
    %p55 = scmp.lt.s32.totalorder %s54, 0
    %s56 = scalar_select %p55, %s54, 0
    %s57 = smul.addr %s56, 8
    %s58 = scalar_lea.vmem %s1, %s57
    %s59 = sadd.s32 0, 0
    %p60 = scmp.lt.s32.totalorder %s59, 0
    %s61 = scalar_select %p60, %s59, 0
    %p62 = scmp.lt.s32.totalorder %s61, 0
    %s63 = scalar_select %p62, %s61, 0
    %s64 = smul.addr %s63, 8
    %s65 = scalar_lea.vmem %s2, %s64
    %s66 = sadd.s32 0, 0
    %p67 = scmp.lt.s32.totalorder %s66, 0
    %s68 = scalar_select %p67, %s66, 0
    %p69 = scmp.lt.s32.totalorder %s68, 0
    %s70 = scalar_select %p69, %s68, 0
    %s71 = smul.addr %s70, 8
    %s72 = scalar_lea.vmem %s0, %s71
    %s73 = sadd.s32 0, 0
    %p74 = scmp.lt.s32.totalorder %s73, 0
    %s75 = scalar_select %p74, %s73, 0
    %s76 = sadd.s32 0, 0
    %p77 = scmp.lt.s32.totalorder %s76, 0
    %s78 = scalar_select %p77, %s76, 0
    %p79 = scmp.lt.s32.totalorder %s78, 0
    %s80 = scalar_select %p79, %s78, 0
    %s81 = smul.addr %s80, 8
    %s82 = scalar_lea.vmem %s1, %s81
    %s83 = sadd.s32 0, 0
    %p84 = scmp.lt.s32.totalorder %s83, 0
    %s85 = scalar_select %p84, %s83, 0
    %s86 = sadd.s32 0, 0
    %p87 = scmp.lt.s32.totalorder %s86, 0
    %s88 = scalar_select %p87, %s86, 0
    %p89 = scmp.lt.s32.totalorder %s88, 0
    %s90 = scalar_select %p89, %s88, 0
    %s91 = smul.addr %s90, 8
    %s92 = scalar_lea.vmem %s2, %s91
    %s93 = sadd.s32 0, 0
    %p94 = scmp.lt.s32.totalorder %s93, 0
    %s95 = scalar_select %p94, %s93, 0
    %p96 = scmp.eq.s32.totalorder 0, 0
    %p97 = scmp.eq.s32.totalorder 0, 0
    %p98 = pnand %p96, %p97
    %p99 = pneg %p98
    // Predicated region
    $region14: #{tpu_custom_call.1} parent=1 // pred_check
      _
    $region15: #{tpu_custom_call.1} parent=1 // pred_check_branch
      %101 = sbr.rel (%p98) target = $region17
    $region16: #{tpu_custom_call.1} parent=1 // pred_region
      %s102 = scalar_lea.smem [#allocation2], 0
      %103 = sst [smem:[%s102]] 0.0
    $region17: #{tpu_custom_call.1} parent=1 // pred_fallthru
      _
    %v104 = vld [vmem:[%s72] sm:$0xff]
    %v105 = vld [vmem:[%s82] sm:$0xff]
    %v106 = vld [vmem:[%s92] sm:$0xff]
    %v107 = vlaneseq
    %v108 = vand.u32 %v107, 127
    %s109 = smul.u32 0, 32
    %v110 = vstv %s109
    %v111 = vsub.s32 %v105, %v110
    %112 = vset.pattern.permute.xlu0 0
    %113 = vperm.xlu0 %112, %v111
    %v114 = vpop.permute.xlu0 %113
    %vm115 = vcmp.eq.s32.totalorder %v108, %v114
    %s116 = sadd.s32 0, 0
    %s117 = smul.u32 %s116, 8
    %v118 = vlaneseq
    %v119 = vshrl.u32 %v118, 7
    %v120 = vstv %s117
    %v121 = vadd.s32 %v119, %v120
    %vm122 = vcmp.lt.s32.totalorder %v121, 8
    %vm123 = vcmp.ge.s32.totalorder %v105, 0
    %vm124 = vmand %vm122, %vm123
    %vm125 = vcmp.lt.s32.totalorder %v105, 32
    %vm126 = vmand %vm124, %vm125
    %v127 = vsel %vm126, 1, 0
    %128 = vset.pattern.permute.xlu0 0
    %129 = vperm.xlu0 %128, %v127
    %v130 = vpop.permute.xlu0 %129
    %vm131 = vcmp.eq.s32.totalorder %v130, 1
    %vm132 = vmand %vm115, %vm131
    %134 = vset.pattern.permute.xlu0 0
    %135 = vperm.xlu0 %134, %v106
    %v136 = vpop.permute.xlu0 %135
    %v138 = vmul.f32 %v104, %v136
    %v139 = vsel %vm132, %v138, 0.0
    %s140 = sld [smem:[#allocation2]]
    %vm141 = vcmask 261120
    %v142 = vsel %vm141, %v139, 0.0
    %143 = vadd.xlane.f32.xlu0 %v142
    %v144 = vpop.xlane.xlu0 %143
    %v145 = vrot.slane %v144, 4
    %v146 = vadd.f32 %v144, %v145
    %v147 = vrot.slane %v146, 2
    %v148 = vadd.f32 %v146, %v147
    %v149 = vrot.slane %v148, 1
    %v150 = vadd.f32 %v148, %v149
    %s151 = vtos %v150
    %s152 = sadd.f32 %s140, %s151
    %s153 = scalar_lea.smem [#allocation2], 0
    %154 = sst [smem:[%s153]] %s152
    // Predicated region
    $region18: #{tpu_custom_call.1} parent=1 // pred_check
      _
    $region19: #{tpu_custom_call.1} parent=1 // pred_check_branch
      %156 = sbr.rel (%p98) target = $region21
    $region20: #{tpu_custom_call.1} parent=1 // pred_region
      %s157 = sld [smem:[#allocation2]]
      %s158 = ssub.f32 0.0, %s157
      %v159 = vstv %s158
      %160 = vst [vmem:[#allocation3] sm:$0xff] %v159
    $region21: #{tpu_custom_call.1} parent=1 // pred_fallthru
      _
    // Predicated region
    $region22: #{tpu_custom_call.1} parent=1 // pred_check
      _
    $region23: #{tpu_custom_call.1} parent=1 // pred_check_branch
      %162 = sbr.rel (0) target = $region25
    $region24: #{tpu_custom_call.1} parent=1 // pred_region
      %164 = vsyncadd [#allocation4], 0
      %s166 = sshll.u32 [#allocation3], 4
      %s167 = int_to_ptr.vmem [resolvable:$true] %s166
      %s168 = sshll.u32 %s3, 4
      %s169 = int_to_ptr.hbm [resolvable:$true] %s168
      %171 = dma.vmem_to_hbm [thread:$0]  %s167, 128, %s169, [#allocation4]
    $region25: #{tpu_custom_call.1} parent=1 // pred_fallthru
      _
    // Predicated region
    $region26: #{tpu_custom_call.1} parent=1 // pred_check
      _
    $region27: #{tpu_custom_call.1} parent=1 // pred_check_branch
      %173 = sbr.rel (0) target = $region29
    $region28: #{tpu_custom_call.1} parent=1 // pred_region
      %175 = dma.done [#allocation4], 128
    $region29: #{tpu_custom_call.1} parent=1 // pred_fallthru
      _
    %176 = vsyncpa [#allocation4], 1

</llo_original>
